<compile_context>
chip_gen: v7x
topology: tpu7x:2x2x1
jax: 0.10.0
libtpu: 0.0.40
codegen_flags: <defaults>
</compile_context>

<pallas_src>
from functools import partial

import jax
import jax.numpy as jnp
from jax.experimental import pallas as pl
from jax.experimental.pallas import tpu as pltpu


def _round_up(n, m):
    return (n + m - 1) // m * m


def _mlp_kernel(x_ref, w1_ref, b1_ref, w2_ref, b2_ref, w3_ref, b3_ref, o_ref):
    # One batch tile per grid step: three bf16 MXU matmuls with f32
    # accumulation + VPU/EUP activations, fused in one kernel body.
    x = x_ref[...]                                                   # bf16 (TM, in_pad)
    h1 = jnp.dot(x, w1_ref[...], preferred_element_type=jnp.float32) + b1_ref[...]
    h1 = jnp.maximum(h1, 0.0).astype(jnp.bfloat16)                   # ReLU
    h2 = jnp.dot(h1, w2_ref[...], preferred_element_type=jnp.float32) + b2_ref[...]
    h2 = jnp.maximum(h2, 0.0).astype(jnp.bfloat16)                   # ReLU
    logits = jnp.dot(h2, w3_ref[...], preferred_element_type=jnp.float32) + b3_ref[...]
    o_ref[...] = jax.nn.sigmoid(logits)                              # sigmoid on EUP/VPU


def prepare_params(params):
    """One-time weight prep: zero-pad to lane-dense shapes and cast to bf16.

    Returns (padded arrays..., categories). Call once and reuse; the per-call
    forward only reads the already-padded bf16 weights from HBM.
    """
    w1, b1, w2, b2, w3, b3 = params                  # f32, (in, out) layout
    in_features, hid = w1.shape
    categories = w3.shape[1]

    in_pad = _round_up(in_features, 128)             # 1024 -> 1024 (already aligned)
    hid_pad = _round_up(hid, 128)                    # 200  -> 256
    cat_pad = _round_up(categories, 128)             # 3    -> 128

    w1p = jnp.pad(w1, ((0, in_pad - in_features), (0, hid_pad - hid))).astype(jnp.bfloat16)
    b1p = jnp.pad(b1, ((0, 0), (0, hid_pad - hid)))                       # f32
    w2p = jnp.pad(w2, ((0, hid_pad - hid), (0, hid_pad - hid))).astype(jnp.bfloat16)
    b2p = jnp.pad(b2, ((0, 0), (0, hid_pad - hid)))                       # f32
    w3p = jnp.pad(w3, ((0, hid_pad - hid), (0, cat_pad - categories))).astype(jnp.bfloat16)
    b3p = jnp.pad(b3, ((0, 0), (0, cat_pad - categories)))                # f32

    return (w1p, b1p, w2p, b2p, w3p, b3p, categories)


@partial(jax.jit, static_argnames=("categories",))
def _forward_jit(x_nchw, w1p, b1p, w2p, b2p, w3p, b3p, *, categories):
    B = x_nchw.shape[0]
    in_pad, hid_pad = w1p.shape
    cat_pad = w3p.shape[1]

    # Batch tiling: whole batch in one tile while small; cap at 512 rows so
    # large batches pipeline (double-buffered activation DMA) and shard across
    # cores, with bounded VMEM on every generation (incl. v7x's 64 MiB/TC).
    TM = min(_round_up(B, 8), 512)
    B_pad = _round_up(B, TM)
    grid = (B_pad // TM,)

    x = x_nchw.reshape(B, -1)                         # torch .view-style flatten
    in_features = x.shape[1]
    x = jnp.pad(x, ((0, B_pad - B), (0, in_pad - in_features))).astype(jnp.bfloat16)

    def resident(shape):
        # Weights/biases: same block every grid step -> stay VMEM-resident.
        return pl.BlockSpec(shape, lambda i: (0,) * len(shape))

    # VMEM budget ~ 2x tile working set (covers double buffering) + headroom.
    weight_bytes = (w1p.size + w2p.size + w3p.size) * 2 \
        + (b1p.size + b2p.size + b3p.size) * 4
    tile_bytes = TM * in_pad * 2 + TM * cat_pad * 4 + weight_bytes
    vmem_limit = max(4 << 20, 2 * tile_bytes + (1 << 20))

    out = pl.pallas_call(
        _mlp_kernel,
        out_shape=jax.ShapeDtypeStruct((B_pad, cat_pad), jnp.float32),
        grid=grid,
        in_specs=[
            pl.BlockSpec((TM, in_pad), lambda i: (i, 0)),
            resident((in_pad, hid_pad)),
            resident((1, hid_pad)),
            resident((hid_pad, hid_pad)),
            resident((1, hid_pad)),
            resident((hid_pad, cat_pad)),
            resident((1, cat_pad)),
        ],
        out_specs=pl.BlockSpec((TM, cat_pad), lambda i: (i, 0)),
        compiler_params=pltpu.CompilerParams(
            dimension_semantics=("parallel",),
            vmem_limit_bytes=vmem_limit,
        ),
    )(x, w1p, b1p, w2p, b2p, w3p, b3p)

    # Strip batch/category padding (fused into the same jitted program).
    return out[:B, :categories]


def net_forward(x_nchw, prepared):
    """Forward pass of Net. x_nchw: (B, C, P, P) f32 -> (B, categories) f32."""
    w1p, b1p, w2p, b2p, w3p, b3p, categories = prepared
    return _forward_jit(x_nchw, w1p, b1p, w2p, b2p, w3p, b3p,
                        categories=categories)


def init_params(key, num_channels, pix_side, categories, hid=200):
    """Deterministic init mimicking nn.Linear default (uniform +/- 1/sqrt(fan_in)).
    Weights stored as (in_features, out_features)."""
    in_features = num_channels * pix_side * pix_side
    keys = jax.random.split(key, 6)

    def linear(kw, kb, fan_in, fan_out):
        bound = 1.0 / jnp.sqrt(jnp.float32(fan_in))
        w = jax.random.uniform(kw, (fan_in, fan_out), jnp.float32, -bound, bound)
        b = jax.random.uniform(kb, (1, fan_out), jnp.float32, -bound, bound)
        return w, b

    w1, b1 = linear(keys[0], keys[1], in_features, hid)
    w2, b2 = linear(keys[2], keys[3], hid, hid)
    w3, b3 = linear(keys[4], keys[5], hid, categories)
    return (w1, b1, w2, b2, w3, b3)


if __name__ == "__main__":
    # Small shapes consistent with the module: par.num_channels=4,
    # par.pix_side=16, par.categories=3, batch=2.
    B, C, P, CAT = 2, 4, 16, 3

    key = jax.random.PRNGKey(0)
    k_x, k_p = jax.random.split(key)
    x = jax.random.normal(k_x, (B, C, P, P), dtype=jnp.float32)
    params = init_params(k_p, num_channels=C, pix_side=P, categories=CAT)

    # One-time weight prep (pad + bf16 cast), reused across forward calls.
    prepared = jax.block_until_ready(prepare_params(params))

    out = net_forward(x, prepared)
    out = jax.block_until_ready(out)

    # Sanity: output shape and sigmoid range.
    assert out.shape == (B, CAT)
    assert bool(jnp.all((out >= 0.0) & (out <= 1.0)))

    print("KERNEL_OK")
</pallas_src>

<mosaic_0001>
module attributes {stable_mosaic.version = 11 : i64} {
  func.func @_mlp_kernel(%arg0: i32, %arg1: memref<8x1024xbf16, #tpu.memory_space<vmem>>, %arg2: memref<1024x256xbf16, #tpu.memory_space<vmem>>, %arg3: memref<1x256xf32, #tpu.memory_space<vmem>>, %arg4: memref<256x256xbf16, #tpu.memory_space<vmem>>, %arg5: memref<1x256xf32, #tpu.memory_space<vmem>>, %arg6: memref<256x128xbf16, #tpu.memory_space<vmem>>, %arg7: memref<1x128xf32, #tpu.memory_space<vmem>>, %arg8: memref<8x128xf32, #tpu.memory_space<vmem>>) attributes {dimension_semantics = [#tpu.dimension_semantics<parallel>], iteration_bounds = array<i64: 1>, scalar_prefetch = 0 : i64, scratch_operands = 0 : i64, tpu.core_type = #tpu.core_type<tc>, window_params = [{transform_indices = @transform_0, window_bounds = array<i64: 8, 1024>}, {pipeline_mode = #tpu.pipeline_mode<synchronous>, transform_indices = @transform_1, window_bounds = array<i64: 1024, 256>}, {pipeline_mode = #tpu.pipeline_mode<synchronous>, transform_indices = @transform_2, window_bounds = array<i64: 1, 256>}, {pipeline_mode = #tpu.pipeline_mode<synchronous>, transform_indices = @transform_3, window_bounds = array<i64: 256, 256>}, {pipeline_mode = #tpu.pipeline_mode<synchronous>, transform_indices = @transform_4, window_bounds = array<i64: 1, 256>}, {pipeline_mode = #tpu.pipeline_mode<synchronous>, transform_indices = @transform_5, window_bounds = array<i64: 256, 128>}, {pipeline_mode = #tpu.pipeline_mode<synchronous>, transform_indices = @transform_6, window_bounds = array<i64: 1, 128>}, {transform_indices = @transform_7, window_bounds = array<i64: 8, 128>}]} {
    %c0 = arith.constant 0 : index
    %c0_0 = arith.constant 0 : index
    %0 = vector.load %arg1[%c0, %c0_0] : memref<8x1024xbf16, #tpu.memory_space<vmem>>, vector<8x1024xbf16>
    %c0_1 = arith.constant 0 : index
    %c0_2 = arith.constant 0 : index
    %1 = vector.load %arg2[%c0_1, %c0_2] : memref<1024x256xbf16, #tpu.memory_space<vmem>>, vector<1024x256xbf16>
    %cst = arith.constant dense<0.000000e+00> : vector<8x256xf32>
    %2 = tpu.matmul %0, %1, %cst {dimension_numbers = #tpu.dot_dimension_numbers<[1], [0], [0], [1], [0, 0, 1, 1], [], []>} : vector<8x1024xbf16>, vector<1024x256xbf16>, vector<8x256xf32> -> vector<8x256xf32>
    %c0_3 = arith.constant 0 : index
    %c0_4 = arith.constant 0 : index
    %3 = vector.load %arg3[%c0_3, %c0_4] : memref<1x256xf32, #tpu.memory_space<vmem>>, vector<1x256xf32>
    %4 = vector.broadcast %3 : vector<1x256xf32> to vector<8x256xf32>
    %5 = arith.addf %2, %4 : vector<8x256xf32>
    %cst_5 = arith.constant 0.000000e+00 : f32
    %6 = vector.broadcast %cst_5 : f32 to vector<8x256xf32>
    %7 = arith.maximumf %5, %6 : vector<8x256xf32>
    %8 = arith.truncf %7 : vector<8x256xf32> to vector<8x256xbf16>
    %c0_6 = arith.constant 0 : index
    %c0_7 = arith.constant 0 : index
    %9 = vector.load %arg4[%c0_6, %c0_7] : memref<256x256xbf16, #tpu.memory_space<vmem>>, vector<256x256xbf16>
    %cst_8 = arith.constant dense<0.000000e+00> : vector<8x256xf32>
    %10 = tpu.matmul %8, %9, %cst_8 {dimension_numbers = #tpu.dot_dimension_numbers<[1], [0], [0], [1], [0, 0, 1, 1], [], []>} : vector<8x256xbf16>, vector<256x256xbf16>, vector<8x256xf32> -> vector<8x256xf32>
    %c0_9 = arith.constant 0 : index
    %c0_10 = arith.constant 0 : index
    %11 = vector.load %arg5[%c0_9, %c0_10] : memref<1x256xf32, #tpu.memory_space<vmem>>, vector<1x256xf32>
    %12 = vector.broadcast %11 : vector<1x256xf32> to vector<8x256xf32>
    %13 = arith.addf %10, %12 : vector<8x256xf32>
    %cst_11 = arith.constant 0.000000e+00 : f32
    %14 = vector.broadcast %cst_11 : f32 to vector<8x256xf32>
    %15 = arith.maximumf %13, %14 : vector<8x256xf32>
    %16 = arith.truncf %15 : vector<8x256xf32> to vector<8x256xbf16>
    %c0_12 = arith.constant 0 : index
    %c0_13 = arith.constant 0 : index
    %17 = vector.load %arg6[%c0_12, %c0_13] : memref<256x128xbf16, #tpu.memory_space<vmem>>, vector<256x128xbf16>
    %cst_14 = arith.constant dense<0.000000e+00> : vector<8x128xf32>
    %18 = tpu.matmul %16, %17, %cst_14 {dimension_numbers = #tpu.dot_dimension_numbers<[1], [0], [0], [1], [0, 0, 1, 1], [], []>} : vector<8x256xbf16>, vector<256x128xbf16>, vector<8x128xf32> -> vector<8x128xf32>
    %c0_15 = arith.constant 0 : index
    %c0_16 = arith.constant 0 : index
    %19 = vector.load %arg7[%c0_15, %c0_16] : memref<1x128xf32, #tpu.memory_space<vmem>>, vector<1x128xf32>
    %20 = vector.broadcast %19 : vector<1x128xf32> to vector<8x128xf32>
    %21 = arith.addf %18, %20 : vector<8x128xf32>
    %22 = arith.negf %21 : vector<8x128xf32>
    %23 = math.exp %22 : vector<8x128xf32>
    %cst_17 = arith.constant 1.000000e+00 : f32
    %24 = vector.broadcast %cst_17 : f32 to vector<8x128xf32>
    %25 = arith.addf %24, %23 : vector<8x128xf32>
    %26 = arith.divf %24, %25 : vector<8x128xf32>
    %c0_18 = arith.constant 0 : index
    %c0_19 = arith.constant 0 : index
    %27 = vector.load %arg8[%c0_18, %c0_19] : memref<8x128xf32, #tpu.memory_space<vmem>>, vector<8x128xf32>
    tpu.vector_store %arg8[%c0_18, %c0_19], %26 {strides = array<i32>} : memref<8x128xf32, #tpu.memory_space<vmem>>, vector<8x128xf32>,
    return
  }
  func.func @transform_0(%arg0: i32) -> (i32, i32) {
    %c0_i32 = arith.constant 0 : i32
    %c0_i32_0 = arith.constant 0 : i32
    return %arg0, %c0_i32 : i32, i32
  }
  func.func @transform_1(%arg0: i32) -> (i32, i32) {
    %c0_i32 = arith.constant 0 : i32
    %c0_i32_0 = arith.constant 0 : i32
    %c0_i32_1 = arith.constant 0 : i32
    return %c0_i32, %c0_i32_0 : i32, i32
  }
  func.func @transform_2(%arg0: i32) -> (i32, i32) {
    %c0_i32 = arith.constant 0 : i32
    %c0_i32_0 = arith.constant 0 : i32
    %c0_i32_1 = arith.constant 0 : i32
    return %c0_i32, %c0_i32_0 : i32, i32
  }
  func.func @transform_3(%arg0: i32) -> (i32, i32) {
    %c0_i32 = arith.constant 0 : i32
    %c0_i32_0 = arith.constant 0 : i32
    %c0_i32_1 = arith.constant 0 : i32
    return %c0_i32, %c0_i32_0 : i32, i32
  }
  func.func @transform_4(%arg0: i32) -> (i32, i32) {
    %c0_i32 = arith.constant 0 : i32
    %c0_i32_0 = arith.constant 0 : i32
    %c0_i32_1 = arith.constant 0 : i32
    return %c0_i32, %c0_i32_0 : i32, i32
  }
  func.func @transform_5(%arg0: i32) -> (i32, i32) {
    %c0_i32 = arith.constant 0 : i32
    %c0_i32_0 = arith.constant 0 : i32
    %c0_i32_1 = arith.constant 0 : i32
    return %c0_i32, %c0_i32_0 : i32, i32
  }
  func.func @transform_6(%arg0: i32) -> (i32, i32) {
    %c0_i32 = arith.constant 0 : i32
    %c0_i32_0 = arith.constant 0 : i32
    %c0_i32_1 = arith.constant 0 : i32
    return %c0_i32, %c0_i32_0 : i32, i32
  }
  func.func @transform_7(%arg0: i32) -> (i32, i32) {
    %c0_i32 = arith.constant 0 : i32
    %c0_i32_0 = arith.constant 0 : i32
    return %arg0, %c0_i32 : i32, i32
  }
}

</mosaic_0001>

<llo_original>
// kernel: _forward_jit.1
$region0: #{_forward_jit.1}
  #allocation0 [shape = 'u32[]', space=smem, size = 0x4, offset = 0x4, fixed_abs, tag = 'smem constant byte address 0x4 - core index']
  #allocation1 [shape = 'u32[144,128]{1,0:T(1,128)}', space=vmem, size = 0x12000, scoped, tag = 'internal scratch']
  %s0 = inlined_call_operand.vmem [shape: bf16[8,1024], index: 0, kind: input, shape index: {}]
  %s1 = inlined_call_operand.hbm [shape: bf16[1024,256], index: 1, kind: input, shape index: {}]
  %s2 = inlined_call_operand.vmem [shape: f32[1,256], index: 2, kind: input, shape index: {}]
  %s3 = inlined_call_operand.vmem [shape: bf16[256,256], index: 3, kind: input, shape index: {}]
  %s4 = inlined_call_operand.vmem [shape: f32[1,256], index: 4, kind: input, shape index: {}]
  %s5 = inlined_call_operand.hbm [shape: bf16[256,128], index: 5, kind: input, shape index: {}]
  %s6 = inlined_call_operand.vmem [shape: f32[1,128], index: 6, kind: input, shape index: {}]
  %s7 = inlined_call_operand.vmem [shape: f32[8,128], index: 7, kind: output, shape index: {}]
  %s8 = sld [smem:[#allocation0]]
  $region46: #{_forward_jit.1} parent=0
    _
  %s10 = ssub.s32 1, %s8
  %s11 = scalar_select 0, %s10, %s8
  $region1: #{_forward_jit.1} parent=0
    #allocation2 [shape = 'u8[524288]{0}', space=vmem, size = 0x80000, scoped, tag = 'input window, operand 1, single buffered']
    #allocation3 [shape = 's32[1]{0}', space=sflag, size = 0x4, scoped, tag = 'scoped memory for _forward_jit.1']
    #allocation4 [shape = 'u8[65536]{0}', space=vmem, size = 0x10000, scoped, tag = 'input window, operand 5, single buffered']
    #allocation5 [shape = 's32[1]{0}', space=sflag, size = 0x4, scoped, tag = 'scoped memory for _forward_jit.1']
    %12 = vsyncpa [#allocation3], 0
    %13 = vsyncpa [#allocation5], 0
    // Predicated region
    $region2: #{_forward_jit.1} parent=1 // pred_check
      _
    $region3: #{_forward_jit.1} parent=1 // pred_check_branch
      %15 = sbr.rel (0) target = $region5
    $region4: #{_forward_jit.1} parent=1 // pred_region
      _
    $region5: #{_forward_jit.1} parent=1 // pred_fallthru
      _
    // Predicated region
    $region6: #{_forward_jit.1} parent=1 // pred_check
      _
    $region7: #{_forward_jit.1} parent=1 // pred_check_branch
      %17 = sbr.rel (0) target = $region9
    $region8: #{_forward_jit.1} parent=1 // pred_region
      %s19 = ssub.s32 16384, 16384
      %20 = vsyncadd [#allocation3], %s19
      %s21 = sshll.u32 [#allocation2], 4
      %s22 = int_to_ptr.vmem [resolvable:$true] %s21
      %27 = dma.hbm_to_vmem [thread:$0]  %s1, 16384, %s22, [#allocation3], 128, 128, 8
    $region9: #{_forward_jit.1} parent=1 // pred_fallthru
      _
    // Predicated region
    $region10: #{_forward_jit.1} parent=1 // pred_check
      _
    $region11: #{_forward_jit.1} parent=1 // pred_check_branch
      %29 = sbr.rel (0) target = $region13
    $region12: #{_forward_jit.1} parent=1 // pred_region
      _
    $region13: #{_forward_jit.1} parent=1 // pred_fallthru
      _
    // Predicated region
    $region14: #{_forward_jit.1} parent=1 // pred_check
      _
    $region15: #{_forward_jit.1} parent=1 // pred_check_branch
      %31 = sbr.rel (0) target = $region17
    $region16: #{_forward_jit.1} parent=1 // pred_region
      _
    $region17: #{_forward_jit.1} parent=1 // pred_fallthru
      _
    // Predicated region
    $region18: #{_forward_jit.1} parent=1 // pred_check
      _
    $region19: #{_forward_jit.1} parent=1 // pred_check_branch
      %33 = sbr.rel (0) target = $region21
    $region20: #{_forward_jit.1} parent=1 // pred_region
      _
    $region21: #{_forward_jit.1} parent=1 // pred_fallthru
      _
    // Predicated region
    $region22: #{_forward_jit.1} parent=1 // pred_check
      _
    $region23: #{_forward_jit.1} parent=1 // pred_check_branch
      %35 = sbr.rel (0) target = $region25
    $region24: #{_forward_jit.1} parent=1 // pred_region
      %s37 = ssub.s32 2048, 2048
      %38 = vsyncadd [#allocation5], %s37
      %s39 = sshll.u32 [#allocation4], 4
      %s40 = int_to_ptr.vmem [resolvable:$true] %s39
      %45 = dma.hbm_to_vmem [thread:$0]  %s5, 2048, %s40, [#allocation5], 64, 64, 4
    $region25: #{_forward_jit.1} parent=1 // pred_fallthru
      _
    // Predicated region
    $region26: #{_forward_jit.1} parent=1 // pred_check
      _
    $region27: #{_forward_jit.1} parent=1 // pred_check_branch
      %47 = sbr.rel (0) target = $region29
    $region28: #{_forward_jit.1} parent=1 // pred_region
      _
    $region29: #{_forward_jit.1} parent=1 // pred_fallthru
      _
    // Predicated region
    $region30: #{_forward_jit.1} parent=1 // pred_check
      _
    $region31: #{_forward_jit.1} parent=1 // pred_check_branch
      %49 = sbr.rel (0) target = $region33
    $region32: #{_forward_jit.1} parent=1 // pred_region
      %50 = dma.done [#allocation3], 16384
    $region33: #{_forward_jit.1} parent=1 // pred_fallthru
      _
    // Predicated region
    $region34: #{_forward_jit.1} parent=1 // pred_check
      _
    $region35: #{_forward_jit.1} parent=1 // pred_check_branch
      %52 = sbr.rel (0) target = $region37
    $region36: #{_forward_jit.1} parent=1 // pred_region
      %53 = dma.done [#allocation5], 2048
    $region37: #{_forward_jit.1} parent=1 // pred_fallthru
      _
    %v55 = vld [vmem:[%s0] sm:$0xff]
    %v56 = vld [vmem:[%s0 + $0x8] sm:$0xff]
    %v57 = vld [vmem:[%s0 + $0x10] sm:$0xff]
    %v58 = vld [vmem:[%s0 + $0x18] sm:$0xff]
    %v59 = vld [vmem:[#allocation2] sm:$0xff]
    %v60 = vld [vmem:[#allocation2 + $0x8] sm:$0xff]
    %v61 = vld [vmem:[#allocation2 + $0x10] sm:$0xff]
    %v62 = vld [vmem:[#allocation2 + $0x18] sm:$0xff]
    %v63 = vld [vmem:[#allocation2 + $0x20] sm:$0xff]
    %v64 = vld [vmem:[#allocation2 + $0x28] sm:$0xff]
    %v65 = vld [vmem:[#allocation2 + $0x30] sm:$0xff]
    %v66 = vld [vmem:[#allocation2 + $0x38] sm:$0xff]
    %v67 = vld [vmem:[#allocation2 + $0x40] sm:$0xff]
    %v68 = vld [vmem:[#allocation2 + $0x48] sm:$0xff]
    %v69 = vld [vmem:[#allocation2 + $0x50] sm:$0xff]
    %v70 = vld [vmem:[#allocation2 + $0x58] sm:$0xff]
    %v71 = vld [vmem:[#allocation2 + $0x60] sm:$0xff]
    %v72 = vld [vmem:[#allocation2 + $0x68] sm:$0xff]
    %v73 = vld [vmem:[#allocation2 + $0x70] sm:$0xff]
    %v74 = vld [vmem:[#allocation2 + $0x78] sm:$0xff]
    %v75 = vld [vmem:[#allocation2 + $0x80] sm:$0xff]
    %v76 = vld [vmem:[#allocation2 + $0x88] sm:$0xff]
    %v77 = vld [vmem:[#allocation2 + $0x90] sm:$0xff]
    %v78 = vld [vmem:[#allocation2 + $0x98] sm:$0xff]
    %v79 = vld [vmem:[#allocation2 + $0xa0] sm:$0xff]
    %v80 = vld [vmem:[#allocation2 + $0xa8] sm:$0xff]
    %v81 = vld [vmem:[#allocation2 + $0xb0] sm:$0xff]
    %v82 = vld [vmem:[#allocation2 + $0xb8] sm:$0xff]
    %v83 = vld [vmem:[#allocation2 + $0xc0] sm:$0xff]
    %v84 = vld [vmem:[#allocation2 + $0xc8] sm:$0xff]
    %v85 = vld [vmem:[#allocation2 + $0xd0] sm:$0xff]
    %v86 = vld [vmem:[#allocation2 + $0xd8] sm:$0xff]
    %v87 = vld [vmem:[#allocation2 + $0xe0] sm:$0xff]
    %v88 = vld [vmem:[#allocation2 + $0xe8] sm:$0xff]
    %v89 = vld [vmem:[#allocation2 + $0xf0] sm:$0xff]
    %v90 = vld [vmem:[#allocation2 + $0xf8] sm:$0xff]
    %v91 = vld [vmem:[#allocation2 + $0x100] sm:$0xff]
    %v92 = vld [vmem:[#allocation2 + $0x108] sm:$0xff]
    %v93 = vld [vmem:[#allocation2 + $0x110] sm:$0xff]
    %v94 = vld [vmem:[#allocation2 + $0x118] sm:$0xff]
    %v95 = vld [vmem:[#allocation2 + $0x120] sm:$0xff]
    %v96 = vld [vmem:[#allocation2 + $0x128] sm:$0xff]
    %v97 = vld [vmem:[#allocation2 + $0x130] sm:$0xff]
    %v98 = vld [vmem:[#allocation2 + $0x138] sm:$0xff]
    %v99 = vld [vmem:[#allocation2 + $0x140] sm:$0xff]
    %v100 = vld [vmem:[#allocation2 + $0x148] sm:$0xff]
    %v101 = vld [vmem:[#allocation2 + $0x150] sm:$0xff]
    %v102 = vld [vmem:[#allocation2 + $0x158] sm:$0xff]
    %v103 = vld [vmem:[#allocation2 + $0x160] sm:$0xff]
    %v104 = vld [vmem:[#allocation2 + $0x168] sm:$0xff]
    %v105 = vld [vmem:[#allocation2 + $0x170] sm:$0xff]
    %v106 = vld [vmem:[#allocation2 + $0x178] sm:$0xff]
    %v107 = vld [vmem:[#allocation2 + $0x180] sm:$0xff]
    %v108 = vld [vmem:[#allocation2 + $0x188] sm:$0xff]
    %v109 = vld [vmem:[#allocation2 + $0x190] sm:$0xff]
    %v110 = vld [vmem:[#allocation2 + $0x198] sm:$0xff]
    %v111 = vld [vmem:[#allocation2 + $0x1a0] sm:$0xff]
    %v112 = vld [vmem:[#allocation2 + $0x1a8] sm:$0xff]
    %v113 = vld [vmem:[#allocation2 + $0x1b0] sm:$0xff]
    %v114 = vld [vmem:[#allocation2 + $0x1b8] sm:$0xff]
    %v115 = vld [vmem:[#allocation2 + $0x1c0] sm:$0xff]
    %v116 = vld [vmem:[#allocation2 + $0x1c8] sm:$0xff]
    %v117 = vld [vmem:[#allocation2 + $0x1d0] sm:$0xff]
    %v118 = vld [vmem:[#allocation2 + $0x1d8] sm:$0xff]
    %v119 = vld [vmem:[#allocation2 + $0x1e0] sm:$0xff]
    %v120 = vld [vmem:[#allocation2 + $0x1e8] sm:$0xff]
    %v121 = vld [vmem:[#allocation2 + $0x1f0] sm:$0xff]
    %v122 = vld [vmem:[#allocation2 + $0x1f8] sm:$0xff]
    %v123 = vld [vmem:[#allocation2 + $0x200] sm:$0xff]
    %v124 = vld [vmem:[#allocation2 + $0x208] sm:$0xff]
    %v125 = vld [vmem:[#allocation2 + $0x210] sm:$0xff]
    %v126 = vld [vmem:[#allocation2 + $0x218] sm:$0xff]
    %v127 = vld [vmem:[#allocation2 + $0x220] sm:$0xff]
    %v128 = vld [vmem:[#allocation2 + $0x228] sm:$0xff]
    %v129 = vld [vmem:[#allocation2 + $0x230] sm:$0xff]
    %v130 = vld [vmem:[#allocation2 + $0x238] sm:$0xff]
    %v131 = vld [vmem:[#allocation2 + $0x240] sm:$0xff]
    %v132 = vld [vmem:[#allocation2 + $0x248] sm:$0xff]
    %v133 = vld [vmem:[#allocation2 + $0x250] sm:$0xff]
    %v134 = vld [vmem:[#allocation2 + $0x258] sm:$0xff]
    %v135 = vld [vmem:[#allocation2 + $0x260] sm:$0xff]
    %v136 = vld [vmem:[#allocation2 + $0x268] sm:$0xff]
    %v137 = vld [vmem:[#allocation2 + $0x270] sm:$0xff]
    %v138 = vld [vmem:[#allocation2 + $0x278] sm:$0xff]
    %v139 = vld [vmem:[#allocation2 + $0x280] sm:$0xff]
    %v140 = vld [vmem:[#allocation2 + $0x288] sm:$0xff]
    %v141 = vld [vmem:[#allocation2 + $0x290] sm:$0xff]
    %v142 = vld [vmem:[#allocation2 + $0x298] sm:$0xff]
    %v143 = vld [vmem:[#allocation2 + $0x2a0] sm:$0xff]
    %v144 = vld [vmem:[#allocation2 + $0x2a8] sm:$0xff]
    %v145 = vld [vmem:[#allocation2 + $0x2b0] sm:$0xff]
    %v146 = vld [vmem:[#allocation2 + $0x2b8] sm:$0xff]
    %v147 = vld [vmem:[#allocation2 + $0x2c0] sm:$0xff]
    %v148 = vld [vmem:[#allocation2 + $0x2c8] sm:$0xff]
    %v149 = vld [vmem:[#allocation2 + $0x2d0] sm:$0xff]
    %v150 = vld [vmem:[#allocation2 + $0x2d8] sm:$0xff]
    %v151 = vld [vmem:[#allocation2 + $0x2e0] sm:$0xff]
    %v152 = vld [vmem:[#allocation2 + $0x2e8] sm:$0xff]
    %v153 = vld [vmem:[#allocation2 + $0x2f0] sm:$0xff]
    %v154 = vld [vmem:[#allocation2 + $0x2f8] sm:$0xff]
    %v155 = vld [vmem:[#allocation2 + $0x300] sm:$0xff]
    %v156 = vld [vmem:[#allocation2 + $0x308] sm:$0xff]
    %v157 = vld [vmem:[#allocation2 + $0x310] sm:$0xff]
    %v158 = vld [vmem:[#allocation2 + $0x318] sm:$0xff]
    %v159 = vld [vmem:[#allocation2 + $0x320] sm:$0xff]
    %v160 = vld [vmem:[#allocation2 + $0x328] sm:$0xff]
    %v161 = vld [vmem:[#allocation2 + $0x330] sm:$0xff]
    %v162 = vld [vmem:[#allocation2 + $0x338] sm:$0xff]
    %v163 = vld [vmem:[#allocation2 + $0x340] sm:$0xff]
    %v164 = vld [vmem:[#allocation2 + $0x348] sm:$0xff]
    %v165 = vld [vmem:[#allocation2 + $0x350] sm:$0xff]
    %v166 = vld [vmem:[#allocation2 + $0x358] sm:$0xff]
    %v167 = vld [vmem:[#allocation2 + $0x360] sm:$0xff]
    %v168 = vld [vmem:[#allocation2 + $0x368] sm:$0xff]
    %v169 = vld [vmem:[#allocation2 + $0x370] sm:$0xff]
    %v170 = vld [vmem:[#allocation2 + $0x378] sm:$0xff]
    %v171 = vld [vmem:[#allocation2 + $0x380] sm:$0xff]
    %v172 = vld [vmem:[#allocation2 + $0x388] sm:$0xff]
    %v173 = vld [vmem:[#allocation2 + $0x390] sm:$0xff]
    %v174 = vld [vmem:[#allocation2 + $0x398] sm:$0xff]
    %v175 = vld [vmem:[#allocation2 + $0x3a0] sm:$0xff]
    %v176 = vld [vmem:[#allocation2 + $0x3a8] sm:$0xff]
    %v177 = vld [vmem:[#allocation2 + $0x3b0] sm:$0xff]
    %v178 = vld [vmem:[#allocation2 + $0x3b8] sm:$0xff]
    %v179 = vld [vmem:[#allocation2 + $0x3c0] sm:$0xff]
    %v180 = vld [vmem:[#allocation2 + $0x3c8] sm:$0xff]
    %v181 = vld [vmem:[#allocation2 + $0x3d0] sm:$0xff]
    %v182 = vld [vmem:[#allocation2 + $0x3d8] sm:$0xff]
    %v183 = vld [vmem:[#allocation2 + $0x3e0] sm:$0xff]
    %v184 = vld [vmem:[#allocation2 + $0x3e8] sm:$0xff]
    %v185 = vld [vmem:[#allocation2 + $0x3f0] sm:$0xff]
    %v186 = vld [vmem:[#allocation2 + $0x3f8] sm:$0xff]
    %v187 = vld [vmem:[%s2] sm:$0x3]
    %v189 = vlaneseq
    %v190 = vshrl.u32 %v189, 7
    %v191 = vsub.s32 0, %v190
    %v192 = vrot.slane %v187, %v191
    %v193 = vlaneseq
    %v194 = vshrl.u32 %v193, 7
    %v195 = vsub.s32 1, %v194
    %v196 = vrot.slane %v187, %v195
    %v203 = vunpack.c.l.b16 %v55
    %v204 = vunpack.c.h.b16 %v55
    %v205 = vunpack.c.l.b16 %v56
    %v206 = vunpack.c.h.b16 %v56
    %v207 = vunpack.c.l.b16 %v57
    %v208 = vunpack.c.h.b16 %v57
    %v209 = vunpack.c.l.b16 %v58
    %v210 = vunpack.c.h.b16 %v58
    %v211 = vpack.c.b16 %v203, %v203
    %v212 = vpack.c.b16 %v204, %v204
    %v213 = vpack.c.b16 %v205, %v205
    %v214 = vpack.c.b16 %v206, %v206
    %v215 = vpack.c.b16 %v207, %v207
    %v216 = vpack.c.b16 %v208, %v208
    %v217 = vpack.c.b16 %v209, %v209
    %v218 = vpack.c.b16 %v210, %v210
    %v355 = vunpack.c.l.b16 %v59
    %v356 = vunpack.c.h.b16 %v59
    %v357 = vunpack.c.l.b16 %v60
    %v358 = vunpack.c.h.b16 %v60
    %v359 = vunpack.c.l.b16 %v61
    %v360 = vunpack.c.h.b16 %v61
    %v361 = vunpack.c.l.b16 %v62
    %v362 = vunpack.c.h.b16 %v62
    %v363 = vunpack.c.l.b16 %v63
    %v364 = vunpack.c.h.b16 %v63
    %v365 = vunpack.c.l.b16 %v64
    %v366 = vunpack.c.h.b16 %v64
    %v367 = vunpack.c.l.b16 %v65
    %v368 = vunpack.c.h.b16 %v65
    %v369 = vunpack.c.l.b16 %v66
    %v370 = vunpack.c.h.b16 %v66
    %v371 = vunpack.c.l.b16 %v67
    %v372 = vunpack.c.h.b16 %v67
    %v373 = vunpack.c.l.b16 %v68
    %v374 = vunpack.c.h.b16 %v68
    %v375 = vunpack.c.l.b16 %v69
    %v376 = vunpack.c.h.b16 %v69
    %v377 = vunpack.c.l.b16 %v70
    %v378 = vunpack.c.h.b16 %v70
    %v379 = vunpack.c.l.b16 %v71
    %v380 = vunpack.c.h.b16 %v71
    %v381 = vunpack.c.l.b16 %v72
    %v382 = vunpack.c.h.b16 %v72
    %v383 = vunpack.c.l.b16 %v73
    %v384 = vunpack.c.h.b16 %v73
    %v385 = vunpack.c.l.b16 %v74
    %v386 = vunpack.c.h.b16 %v74
    %v387 = vunpack.c.l.b16 %v75
    %v388 = vunpack.c.h.b16 %v75
    %v389 = vunpack.c.l.b16 %v76
    %v390 = vunpack.c.h.b16 %v76
    %v391 = vunpack.c.l.b16 %v77
    %v392 = vunpack.c.h.b16 %v77
    %v393 = vunpack.c.l.b16 %v78
    %v394 = vunpack.c.h.b16 %v78
    %v395 = vunpack.c.l.b16 %v79
    %v396 = vunpack.c.h.b16 %v79
    %v397 = vunpack.c.l.b16 %v80
    %v398 = vunpack.c.h.b16 %v80
    %v399 = vunpack.c.l.b16 %v81
    %v400 = vunpack.c.h.b16 %v81
    %v401 = vunpack.c.l.b16 %v82
    %v402 = vunpack.c.h.b16 %v82
    %v403 = vunpack.c.l.b16 %v83
    %v404 = vunpack.c.h.b16 %v83
    %v405 = vunpack.c.l.b16 %v84
    %v406 = vunpack.c.h.b16 %v84
    %v407 = vunpack.c.l.b16 %v85
    %v408 = vunpack.c.h.b16 %v85
    %v409 = vunpack.c.l.b16 %v86
    %v410 = vunpack.c.h.b16 %v86
    %v411 = vunpack.c.l.b16 %v87
    %v412 = vunpack.c.h.b16 %v87
    %v413 = vunpack.c.l.b16 %v88
    %v414 = vunpack.c.h.b16 %v88
    %v415 = vunpack.c.l.b16 %v89
    %v416 = vunpack.c.h.b16 %v89
    %v417 = vunpack.c.l.b16 %v90
    %v418 = vunpack.c.h.b16 %v90
    %v419 = vunpack.c.l.b16 %v91
    %v420 = vunpack.c.h.b16 %v91
    %v421 = vunpack.c.l.b16 %v92
    %v422 = vunpack.c.h.b16 %v92
    %v423 = vunpack.c.l.b16 %v93
    %v424 = vunpack.c.h.b16 %v93
    %v425 = vunpack.c.l.b16 %v94
    %v426 = vunpack.c.h.b16 %v94
    %v427 = vunpack.c.l.b16 %v95
    %v428 = vunpack.c.h.b16 %v95
    %v429 = vunpack.c.l.b16 %v96
    %v430 = vunpack.c.h.b16 %v96
    %v431 = vunpack.c.l.b16 %v97
    %v432 = vunpack.c.h.b16 %v97
    %v433 = vunpack.c.l.b16 %v98
    %v434 = vunpack.c.h.b16 %v98
    %v435 = vunpack.c.l.b16 %v99
    %v436 = vunpack.c.h.b16 %v99
    %v437 = vunpack.c.l.b16 %v100
    %v438 = vunpack.c.h.b16 %v100
    %v439 = vunpack.c.l.b16 %v101
    %v440 = vunpack.c.h.b16 %v101
    %v441 = vunpack.c.l.b16 %v102
    %v442 = vunpack.c.h.b16 %v102
    %v443 = vunpack.c.l.b16 %v103
    %v444 = vunpack.c.h.b16 %v103
    %v445 = vunpack.c.l.b16 %v104
    %v446 = vunpack.c.h.b16 %v104
    %v447 = vunpack.c.l.b16 %v105
    %v448 = vunpack.c.h.b16 %v105
    %v449 = vunpack.c.l.b16 %v106
    %v450 = vunpack.c.h.b16 %v106
    %v451 = vunpack.c.l.b16 %v107
    %v452 = vunpack.c.h.b16 %v107
    %v453 = vunpack.c.l.b16 %v108
    %v454 = vunpack.c.h.b16 %v108
    %v455 = vunpack.c.l.b16 %v109
    %v456 = vunpack.c.h.b16 %v109
    %v457 = vunpack.c.l.b16 %v110
    %v458 = vunpack.c.h.b16 %v110
    %v459 = vunpack.c.l.b16 %v111
    %v460 = vunpack.c.h.b16 %v111
    %v461 = vunpack.c.l.b16 %v112
    %v462 = vunpack.c.h.b16 %v112
    %v463 = vunpack.c.l.b16 %v113
    %v464 = vunpack.c.h.b16 %v113
    %v465 = vunpack.c.l.b16 %v114
    %v466 = vunpack.c.h.b16 %v114
    %v467 = vunpack.c.l.b16 %v115
    %v468 = vunpack.c.h.b16 %v115
    %v469 = vunpack.c.l.b16 %v116
    %v470 = vunpack.c.h.b16 %v116
    %v471 = vunpack.c.l.b16 %v117
    %v472 = vunpack.c.h.b16 %v117
    %v473 = vunpack.c.l.b16 %v118
    %v474 = vunpack.c.h.b16 %v118
    %v475 = vunpack.c.l.b16 %v119
    %v476 = vunpack.c.h.b16 %v119
    %v477 = vunpack.c.l.b16 %v120
    %v478 = vunpack.c.h.b16 %v120
    %v479 = vunpack.c.l.b16 %v121
    %v480 = vunpack.c.h.b16 %v121
    %v481 = vunpack.c.l.b16 %v122
    %v482 = vunpack.c.h.b16 %v122
    %v483 = vunpack.c.l.b16 %v123
    %v484 = vunpack.c.h.b16 %v123
    %v485 = vunpack.c.l.b16 %v124
    %v486 = vunpack.c.h.b16 %v124
    %v487 = vunpack.c.l.b16 %v125
    %v488 = vunpack.c.h.b16 %v125
    %v489 = vunpack.c.l.b16 %v126
    %v490 = vunpack.c.h.b16 %v126
    %v491 = vunpack.c.l.b16 %v127
    %v492 = vunpack.c.h.b16 %v127
    %v493 = vunpack.c.l.b16 %v128
    %v494 = vunpack.c.h.b16 %v128
    %v495 = vunpack.c.l.b16 %v129
    %v496 = vunpack.c.h.b16 %v129
    %v497 = vunpack.c.l.b16 %v130
    %v498 = vunpack.c.h.b16 %v130
    %v499 = vunpack.c.l.b16 %v131
    %v500 = vunpack.c.h.b16 %v131
    %v501 = vunpack.c.l.b16 %v132
    %v502 = vunpack.c.h.b16 %v132
    %v503 = vunpack.c.l.b16 %v133
    %v504 = vunpack.c.h.b16 %v133
    %v505 = vunpack.c.l.b16 %v134
    %v506 = vunpack.c.h.b16 %v134
    %v507 = vunpack.c.l.b16 %v135
    %v508 = vunpack.c.h.b16 %v135
    %v509 = vunpack.c.l.b16 %v136
    %v510 = vunpack.c.h.b16 %v136
    %v511 = vunpack.c.l.b16 %v137
    %v512 = vunpack.c.h.b16 %v137
    %v513 = vunpack.c.l.b16 %v138
    %v514 = vunpack.c.h.b16 %v138
    %v515 = vunpack.c.l.b16 %v139
    %v516 = vunpack.c.h.b16 %v139
    %v517 = vunpack.c.l.b16 %v140
    %v518 = vunpack.c.h.b16 %v140
    %v519 = vunpack.c.l.b16 %v141
    %v520 = vunpack.c.h.b16 %v141
    %v521 = vunpack.c.l.b16 %v142
    %v522 = vunpack.c.h.b16 %v142
    %v523 = vunpack.c.l.b16 %v143
    %v524 = vunpack.c.h.b16 %v143
    %v525 = vunpack.c.l.b16 %v144
    %v526 = vunpack.c.h.b16 %v144
    %v527 = vunpack.c.l.b16 %v145
    %v528 = vunpack.c.h.b16 %v145
    %v529 = vunpack.c.l.b16 %v146
    %v530 = vunpack.c.h.b16 %v146
    %v531 = vunpack.c.l.b16 %v147
    %v532 = vunpack.c.h.b16 %v147
    %v533 = vunpack.c.l.b16 %v148
    %v534 = vunpack.c.h.b16 %v148
    %v535 = vunpack.c.l.b16 %v149
    %v536 = vunpack.c.h.b16 %v149
    %v537 = vunpack.c.l.b16 %v150
    %v538 = vunpack.c.h.b16 %v150
    %v539 = vunpack.c.l.b16 %v151
    %v540 = vunpack.c.h.b16 %v151
    %v541 = vunpack.c.l.b16 %v152
    %v542 = vunpack.c.h.b16 %v152
    %v543 = vunpack.c.l.b16 %v153
    %v544 = vunpack.c.h.b16 %v153
    %v545 = vunpack.c.l.b16 %v154
    %v546 = vunpack.c.h.b16 %v154
    %v547 = vunpack.c.l.b16 %v155
    %v548 = vunpack.c.h.b16 %v155
    %v549 = vunpack.c.l.b16 %v156
    %v550 = vunpack.c.h.b16 %v156
    %v551 = vunpack.c.l.b16 %v157
    %v552 = vunpack.c.h.b16 %v157
    %v553 = vunpack.c.l.b16 %v158
    %v554 = vunpack.c.h.b16 %v158
    %v555 = vunpack.c.l.b16 %v159
    %v556 = vunpack.c.h.b16 %v159
    %v557 = vunpack.c.l.b16 %v160
    %v558 = vunpack.c.h.b16 %v160
    %v559 = vunpack.c.l.b16 %v161
    %v560 = vunpack.c.h.b16 %v161
    %v561 = vunpack.c.l.b16 %v162
    %v562 = vunpack.c.h.b16 %v162
    %v563 = vunpack.c.l.b16 %v163
    %v564 = vunpack.c.h.b16 %v163
    %v565 = vunpack.c.l.b16 %v164
    %v566 = vunpack.c.h.b16 %v164
    %v567 = vunpack.c.l.b16 %v165
    %v568 = vunpack.c.h.b16 %v165
    %v569 = vunpack.c.l.b16 %v166
    %v570 = vunpack.c.h.b16 %v166
    %v571 = vunpack.c.l.b16 %v167
    %v572 = vunpack.c.h.b16 %v167
    %v573 = vunpack.c.l.b16 %v168
    %v574 = vunpack.c.h.b16 %v168
    %v575 = vunpack.c.l.b16 %v169
    %v576 = vunpack.c.h.b16 %v169
    %v577 = vunpack.c.l.b16 %v170
    %v578 = vunpack.c.h.b16 %v170
    %v579 = vunpack.c.l.b16 %v171
    %v580 = vunpack.c.h.b16 %v171
    %v581 = vunpack.c.l.b16 %v172
    %v582 = vunpack.c.h.b16 %v172
    %v583 = vunpack.c.l.b16 %v173
    %v584 = vunpack.c.h.b16 %v173
    %v585 = vunpack.c.l.b16 %v174
    %v586 = vunpack.c.h.b16 %v174
    %v587 = vunpack.c.l.b16 %v175
    %v588 = vunpack.c.h.b16 %v175
    %v589 = vunpack.c.l.b16 %v176
    %v590 = vunpack.c.h.b16 %v176
    %v591 = vunpack.c.l.b16 %v177
    %v592 = vunpack.c.h.b16 %v177
    %v593 = vunpack.c.l.b16 %v178
    %v594 = vunpack.c.h.b16 %v178
    %v595 = vunpack.c.l.b16 %v179
    %v596 = vunpack.c.h.b16 %v179
    %v597 = vunpack.c.l.b16 %v180
    %v598 = vunpack.c.h.b16 %v180
    %v599 = vunpack.c.l.b16 %v181
    %v600 = vunpack.c.h.b16 %v181
    %v601 = vunpack.c.l.b16 %v182
    %v602 = vunpack.c.h.b16 %v182
    %v603 = vunpack.c.l.b16 %v183
    %v604 = vunpack.c.h.b16 %v183
    %v605 = vunpack.c.l.b16 %v184
    %v606 = vunpack.c.h.b16 %v184
    %v607 = vunpack.c.l.b16 %v185
    %v608 = vunpack.c.h.b16 %v185
    %v609 = vunpack.c.l.b16 %v186
    %v610 = vunpack.c.h.b16 %v186
    %v611 = vpack.c.b16 %v357, %v355
    %v612 = vpack.c.b16 %v358, %v356
    %v613 = vpack.c.b16 %v361, %v359
    %v614 = vpack.c.b16 %v362, %v360
    %v615 = vpack.c.b16 %v365, %v363
    %v616 = vpack.c.b16 %v366, %v364
    %v617 = vpack.c.b16 %v369, %v367
    %v618 = vpack.c.b16 %v370, %v368
    %v619 = vpack.c.b16 %v373, %v371
    %v620 = vpack.c.b16 %v374, %v372
    %v621 = vpack.c.b16 %v377, %v375
    %v622 = vpack.c.b16 %v378, %v376
    %v623 = vpack.c.b16 %v381, %v379
    %v624 = vpack.c.b16 %v382, %v380
    %v625 = vpack.c.b16 %v385, %v383
    %v626 = vpack.c.b16 %v386, %v384
    %v627 = vpack.c.b16 %v389, %v387
    %v628 = vpack.c.b16 %v390, %v388
    %v629 = vpack.c.b16 %v393, %v391
    %v630 = vpack.c.b16 %v394, %v392
    %v631 = vpack.c.b16 %v397, %v395
    %v632 = vpack.c.b16 %v398, %v396
    %v633 = vpack.c.b16 %v401, %v399
    %v634 = vpack.c.b16 %v402, %v400
    %v635 = vpack.c.b16 %v405, %v403
    %v636 = vpack.c.b16 %v406, %v404
    %v637 = vpack.c.b16 %v409, %v407
    %v638 = vpack.c.b16 %v410, %v408
    %v639 = vpack.c.b16 %v413, %v411
    %v640 = vpack.c.b16 %v414, %v412
    %v641 = vpack.c.b16 %v417, %v415
    %v642 = vpack.c.b16 %v418, %v416
    %v643 = vpack.c.b16 %v421, %v419
    %v644 = vpack.c.b16 %v422, %v420
    %v645 = vpack.c.b16 %v425, %v423
    %v646 = vpack.c.b16 %v426, %v424
    %v647 = vpack.c.b16 %v429, %v427
    %v648 = vpack.c.b16 %v430, %v428
    %v649 = vpack.c.b16 %v433, %v431
    %v650 = vpack.c.b16 %v434, %v432
    %v651 = vpack.c.b16 %v437, %v435
    %v652 = vpack.c.b16 %v438, %v436
    %v653 = vpack.c.b16 %v441, %v439
    %v654 = vpack.c.b16 %v442, %v440
    %v655 = vpack.c.b16 %v445, %v443
    %v656 = vpack.c.b16 %v446, %v444
    %v657 = vpack.c.b16 %v449, %v447
    %v658 = vpack.c.b16 %v450, %v448
    %v659 = vpack.c.b16 %v453, %v451
    %v660 = vpack.c.b16 %v454, %v452
    %v661 = vpack.c.b16 %v457, %v455
    %v662 = vpack.c.b16 %v458, %v456
    %v663 = vpack.c.b16 %v461, %v459
    %v664 = vpack.c.b16 %v462, %v460
    %v665 = vpack.c.b16 %v465, %v463
    %v666 = vpack.c.b16 %v466, %v464
    %v667 = vpack.c.b16 %v469, %v467
    %v668 = vpack.c.b16 %v470, %v468
    %v669 = vpack.c.b16 %v473, %v471
    %v670 = vpack.c.b16 %v474, %v472
    %v671 = vpack.c.b16 %v477, %v475
    %v672 = vpack.c.b16 %v478, %v476
    %v673 = vpack.c.b16 %v481, %v479
    %v674 = vpack.c.b16 %v482, %v480
    %v675 = vpack.c.b16 %v485, %v483
    %v676 = vpack.c.b16 %v486, %v484
    %v677 = vpack.c.b16 %v489, %v487
    %v678 = vpack.c.b16 %v490, %v488
    %v679 = vpack.c.b16 %v493, %v491
    %v680 = vpack.c.b16 %v494, %v492
    %v681 = vpack.c.b16 %v497, %v495
    %v682 = vpack.c.b16 %v498, %v496
    %v683 = vpack.c.b16 %v501, %v499
    %v684 = vpack.c.b16 %v502, %v500
    %v685 = vpack.c.b16 %v505, %v503
    %v686 = vpack.c.b16 %v506, %v504
    %v687 = vpack.c.b16 %v509, %v507
    %v688 = vpack.c.b16 %v510, %v508
    %v689 = vpack.c.b16 %v513, %v511
    %v690 = vpack.c.b16 %v514, %v512
    %v691 = vpack.c.b16 %v517, %v515
    %v692 = vpack.c.b16 %v518, %v516
    %v693 = vpack.c.b16 %v521, %v519
    %v694 = vpack.c.b16 %v522, %v520
    %v695 = vpack.c.b16 %v525, %v523
    %v696 = vpack.c.b16 %v526, %v524
    %v697 = vpack.c.b16 %v529, %v527
    %v698 = vpack.c.b16 %v530, %v528
    %v699 = vpack.c.b16 %v533, %v531
    %v700 = vpack.c.b16 %v534, %v532
    %v701 = vpack.c.b16 %v537, %v535
    %v702 = vpack.c.b16 %v538, %v536
    %v703 = vpack.c.b16 %v541, %v539
    %v704 = vpack.c.b16 %v542, %v540
    %v705 = vpack.c.b16 %v545, %v543
    %v706 = vpack.c.b16 %v546, %v544
    %v707 = vpack.c.b16 %v549, %v547
    %v708 = vpack.c.b16 %v550, %v548
    %v709 = vpack.c.b16 %v553, %v551
    %v710 = vpack.c.b16 %v554, %v552
    %v711 = vpack.c.b16 %v557, %v555
    %v712 = vpack.c.b16 %v558, %v556
    %v713 = vpack.c.b16 %v561, %v559
    %v714 = vpack.c.b16 %v562, %v560
    %v715 = vpack.c.b16 %v565, %v563
    %v716 = vpack.c.b16 %v566, %v564
    %v717 = vpack.c.b16 %v569, %v567
    %v718 = vpack.c.b16 %v570, %v568
    %v719 = vpack.c.b16 %v573, %v571
    %v720 = vpack.c.b16 %v574, %v572
    %v721 = vpack.c.b16 %v577, %v575
    %v722 = vpack.c.b16 %v578, %v576
    %v723 = vpack.c.b16 %v581, %v579
    %v724 = vpack.c.b16 %v582, %v580
    %v725 = vpack.c.b16 %v585, %v583
    %v726 = vpack.c.b16 %v586, %v584
    %v727 = vpack.c.b16 %v589, %v587
    %v728 = vpack.c.b16 %v590, %v588
    %v729 = vpack.c.b16 %v593, %v591
    %v730 = vpack.c.b16 %v594, %v592
    %v731 = vpack.c.b16 %v597, %v595
    %v732 = vpack.c.b16 %v598, %v596
    %v733 = vpack.c.b16 %v601, %v599
    %v734 = vpack.c.b16 %v602, %v600
    %v735 = vpack.c.b16 %v605, %v603
    %v736 = vpack.c.b16 %v606, %v604
    %v737 = vpack.c.b16 %v609, %v607
    %v738 = vpack.c.b16 %v610, %v608
    %867 = vmatprep.subr.bf16.mxu0 %v612
    %868 = vmatpush1.bf16.msra.mxu0 %v611
    %869 = vmatprep.subr.bf16.mxu0 %v614
    %870 = vmatpush1.bf16.msra.mxu0 %v613
    %871 = vmatprep.subr.bf16.mxu0 %v616
    %872 = vmatpush1.bf16.msra.mxu0 %v615
    %873 = vmatprep.subr.bf16.mxu0 %v618
    %874 = vmatpush1.bf16.msra.mxu0 %v617
    %875 = vmatprep.subr.bf16.mxu0 %v620
    %876 = vmatpush1.bf16.msra.mxu0 %v619
    %877 = vmatprep.subr.bf16.mxu0 %v622
    %878 = vmatpush1.bf16.msra.mxu0 %v621
    %879 = vmatprep.subr.bf16.mxu0 %v624
    %880 = vmatpush1.bf16.msra.mxu0 %v623
    %881 = vmatprep.subr.bf16.mxu0 %v626
    %882 = vmatpush1.bf16.msra.mxu0 %v625
    %883 = vmatprep.subr.bf16.mxu0 %v628
    %884 = vmatpush1.bf16.msra.mxu0 %v627
    %885 = vmatprep.subr.bf16.mxu0 %v630
    %886 = vmatpush1.bf16.msra.mxu0 %v629
    %887 = vmatprep.subr.bf16.mxu0 %v632
    %888 = vmatpush1.bf16.msra.mxu0 %v631
    %889 = vmatprep.subr.bf16.mxu0 %v634
    %890 = vmatpush1.bf16.msra.mxu0 %v633
    %891 = vmatprep.subr.bf16.mxu0 %v636
    %892 = vmatpush1.bf16.msra.mxu0 %v635
    %893 = vmatprep.subr.bf16.mxu0 %v638
    %894 = vmatpush1.bf16.msra.mxu0 %v637
    %895 = vmatprep.subr.bf16.mxu0 %v640
    %896 = vmatpush1.bf16.msra.mxu0 %v639
    %897 = vmatprep.subr.bf16.mxu0 %v642
    %898 = vmatpush1.bf16.msra.mxu0 %v641
    %899 = vmatprep.mubr.bf16.mxu0 %v212
    %900 = vmatmul.mubr.bf16.gmra.mrb[0].mxu0 %v211
    %v901 = vpop.f32.mrb[0].mxu0
    %v902 = vadd.f32 %v192, %v901
    %v903 = vpop.f32.mrb[0].mxu0
    %v904 = vadd.f32 %v196, %v903
    %v905 = vpop.f32.mrb[0].mxu0
    %v906 = vpop.f32.mrb[0].mxu0
    %907 = vdwg.mxu0
    %908 = vmatprep.subr.bf16.mxu0 %v644
    %909 = vmatpush1.bf16.msra.mxu0 %v643
    %910 = vmatprep.subr.bf16.mxu0 %v646
    %911 = vmatpush1.bf16.msra.mxu0 %v645
    %912 = vmatprep.subr.bf16.mxu0 %v648
    %913 = vmatpush1.bf16.msra.mxu0 %v647
    %914 = vmatprep.subr.bf16.mxu0 %v650
    %915 = vmatpush1.bf16.msra.mxu0 %v649
    %916 = vmatprep.subr.bf16.mxu0 %v652
    %917 = vmatpush1.bf16.msra.mxu0 %v651
    %918 = vmatprep.subr.bf16.mxu0 %v654
    %919 = vmatpush1.bf16.msra.mxu0 %v653
    %920 = vmatprep.subr.bf16.mxu0 %v656
    %921 = vmatpush1.bf16.msra.mxu0 %v655
    %922 = vmatprep.subr.bf16.mxu0 %v658
    %923 = vmatpush1.bf16.msra.mxu0 %v657
    %924 = vmatprep.subr.bf16.mxu0 %v660
    %925 = vmatpush1.bf16.msra.mxu0 %v659
    %926 = vmatprep.subr.bf16.mxu0 %v662
    %927 = vmatpush1.bf16.msra.mxu0 %v661
    %928 = vmatprep.subr.bf16.mxu0 %v664
    %929 = vmatpush1.bf16.msra.mxu0 %v663
    %930 = vmatprep.subr.bf16.mxu0 %v666
    %931 = vmatpush1.bf16.msra.mxu0 %v665
    %932 = vmatprep.subr.bf16.mxu0 %v668
    %933 = vmatpush1.bf16.msra.mxu0 %v667
    %934 = vmatprep.subr.bf16.mxu0 %v670
    %935 = vmatpush1.bf16.msra.mxu0 %v669
    %936 = vmatprep.subr.bf16.mxu0 %v672
    %937 = vmatpush1.bf16.msra.mxu0 %v671
    %938 = vmatprep.subr.bf16.mxu0 %v674
    %939 = vmatpush1.bf16.msra.mxu0 %v673
    %940 = vmatprep.mubr.bf16.mxu0 %v214
    %941 = vmatmul.mubr.bf16.gmra.mrb[0].mxu0 %v213
    %v942 = vpop.f32.mrb[0].mxu0
    %v943 = vadd.f32 %v902, %v942
    %v944 = vpop.f32.mrb[0].mxu0
    %v945 = vadd.f32 %v904, %v944
    %v946 = vpop.f32.mrb[0].mxu0
    %v947 = vpop.f32.mrb[0].mxu0
    %948 = vdwg.mxu0
    %949 = vmatprep.subr.bf16.mxu0 %v676
    %950 = vmatpush1.bf16.msra.mxu0 %v675
    %951 = vmatprep.subr.bf16.mxu0 %v678
    %952 = vmatpush1.bf16.msra.mxu0 %v677
    %953 = vmatprep.subr.bf16.mxu0 %v680
    %954 = vmatpush1.bf16.msra.mxu0 %v679
    %955 = vmatprep.subr.bf16.mxu0 %v682
    %956 = vmatpush1.bf16.msra.mxu0 %v681
    %957 = vmatprep.subr.bf16.mxu0 %v684
    %958 = vmatpush1.bf16.msra.mxu0 %v683
    %959 = vmatprep.subr.bf16.mxu0 %v686
    %960 = vmatpush1.bf16.msra.mxu0 %v685
    %961 = vmatprep.subr.bf16.mxu0 %v688
    %962 = vmatpush1.bf16.msra.mxu0 %v687
    %963 = vmatprep.subr.bf16.mxu0 %v690
    %964 = vmatpush1.bf16.msra.mxu0 %v689
    %965 = vmatprep.subr.bf16.mxu0 %v692
    %966 = vmatpush1.bf16.msra.mxu0 %v691
    %967 = vmatprep.subr.bf16.mxu0 %v694
    %968 = vmatpush1.bf16.msra.mxu0 %v693
    %969 = vmatprep.subr.bf16.mxu0 %v696
    %970 = vmatpush1.bf16.msra.mxu0 %v695
    %971 = vmatprep.subr.bf16.mxu0 %v698
    %972 = vmatpush1.bf16.msra.mxu0 %v697
    %973 = vmatprep.subr.bf16.mxu0 %v700
    %974 = vmatpush1.bf16.msra.mxu0 %v699
    %975 = vmatprep.subr.bf16.mxu0 %v702
    %976 = vmatpush1.bf16.msra.mxu0 %v701
    %977 = vmatprep.subr.bf16.mxu0 %v704
    %978 = vmatpush1.bf16.msra.mxu0 %v703
    %979 = vmatprep.subr.bf16.mxu0 %v706
    %980 = vmatpush1.bf16.msra.mxu0 %v705
    %981 = vmatprep.mubr.bf16.mxu0 %v216
    %982 = vmatmul.mubr.bf16.gmra.mrb[0].mxu0 %v215
    %v983 = vpop.f32.mrb[0].mxu0
    %v984 = vadd.f32 %v943, %v983
    %v985 = vpop.f32.mrb[0].mxu0
    %v986 = vadd.f32 %v945, %v985
    %v987 = vpop.f32.mrb[0].mxu0
    %v988 = vpop.f32.mrb[0].mxu0
    %989 = vdwg.mxu0
    %990 = vmatprep.subr.bf16.mxu0 %v708
    %991 = vmatpush1.bf16.msra.mxu0 %v707
    %992 = vmatprep.subr.bf16.mxu0 %v710
    %993 = vmatpush1.bf16.msra.mxu0 %v709
    %994 = vmatprep.subr.bf16.mxu0 %v712
    %995 = vmatpush1.bf16.msra.mxu0 %v711
    %996 = vmatprep.subr.bf16.mxu0 %v714
    %997 = vmatpush1.bf16.msra.mxu0 %v713
    %998 = vmatprep.subr.bf16.mxu0 %v716
    %999 = vmatpush1.bf16.msra.mxu0 %v715
    %1000 = vmatprep.subr.bf16.mxu0 %v718
    %1001 = vmatpush1.bf16.msra.mxu0 %v717
    %1002 = vmatprep.subr.bf16.mxu0 %v720
    %1003 = vmatpush1.bf16.msra.mxu0 %v719
    %1004 = vmatprep.subr.bf16.mxu0 %v722
    %1005 = vmatpush1.bf16.msra.mxu0 %v721
    %1006 = vmatprep.subr.bf16.mxu0 %v724
    %1007 = vmatpush1.bf16.msra.mxu0 %v723
    %1008 = vmatprep.subr.bf16.mxu0 %v726
    %1009 = vmatpush1.bf16.msra.mxu0 %v725
    %1010 = vmatprep.subr.bf16.mxu0 %v728
    %1011 = vmatpush1.bf16.msra.mxu0 %v727
    %1012 = vmatprep.subr.bf16.mxu0 %v730
    %1013 = vmatpush1.bf16.msra.mxu0 %v729
    %1014 = vmatprep.subr.bf16.mxu0 %v732
    %1015 = vmatpush1.bf16.msra.mxu0 %v731
    %1016 = vmatprep.subr.bf16.mxu0 %v734
    %1017 = vmatpush1.bf16.msra.mxu0 %v733
    %1018 = vmatprep.subr.bf16.mxu0 %v736
    %1019 = vmatpush1.bf16.msra.mxu0 %v735
    %1020 = vmatprep.subr.bf16.mxu0 %v738
    %1021 = vmatpush1.bf16.msra.mxu0 %v737
    %1022 = vmatprep.mubr.bf16.mxu0 %v218
    %1023 = vmatmul.mubr.bf16.gmra.mrb[0].mxu0 %v217
    %v1024 = vpop.f32.mrb[0].mxu0
    %v1025 = vadd.f32 %v984, %v1024
    %v1026 = vpop.f32.mrb[0].mxu0
    %v1027 = vadd.f32 %v986, %v1026
    %v1028 = vpop.f32.mrb[0].mxu0
    %v1029 = vpop.f32.mrb[0].mxu0
    %1030 = vdwg.mxu0
    %v1031 = vmax.f32 %v1025, 0.0
    %v1032 = vmax.f32 %v1027, 0.0
    %v1033 = vpack.c.bf16 %v1031, %v1031
    %v1034 = vpack.c.bf16 %v1032, %v1032
    %v1035 = vld [vmem:[%s3] sm:$0xff]
    %v1036 = vld [vmem:[%s3 + $0x8] sm:$0xff]
    %v1037 = vld [vmem:[%s3 + $0x10] sm:$0xff]
    %v1038 = vld [vmem:[%s3 + $0x18] sm:$0xff]
    %v1039 = vld [vmem:[%s3 + $0x20] sm:$0xff]
    %v1040 = vld [vmem:[%s3 + $0x28] sm:$0xff]
    %v1041 = vld [vmem:[%s3 + $0x30] sm:$0xff]
    %v1042 = vld [vmem:[%s3 + $0x38] sm:$0xff]
    %v1043 = vld [vmem:[%s3 + $0x40] sm:$0xff]
    %v1044 = vld [vmem:[%s3 + $0x48] sm:$0xff]
    %v1045 = vld [vmem:[%s3 + $0x50] sm:$0xff]
    %v1046 = vld [vmem:[%s3 + $0x58] sm:$0xff]
    %v1047 = vld [vmem:[%s3 + $0x60] sm:$0xff]
    %v1048 = vld [vmem:[%s3 + $0x68] sm:$0xff]
    %v1049 = vld [vmem:[%s3 + $0x70] sm:$0xff]
    %v1050 = vld [vmem:[%s3 + $0x78] sm:$0xff]
    %v1051 = vld [vmem:[%s3 + $0x80] sm:$0xff]
    %v1052 = vld [vmem:[%s3 + $0x88] sm:$0xff]
    %v1053 = vld [vmem:[%s3 + $0x90] sm:$0xff]
    %v1054 = vld [vmem:[%s3 + $0x98] sm:$0xff]
    %v1055 = vld [vmem:[%s3 + $0xa0] sm:$0xff]
    %v1056 = vld [vmem:[%s3 + $0xa8] sm:$0xff]
    %v1057 = vld [vmem:[%s3 + $0xb0] sm:$0xff]
    %v1058 = vld [vmem:[%s3 + $0xb8] sm:$0xff]
    %v1059 = vld [vmem:[%s3 + $0xc0] sm:$0xff]
    %v1060 = vld [vmem:[%s3 + $0xc8] sm:$0xff]
    %v1061 = vld [vmem:[%s3 + $0xd0] sm:$0xff]
    %v1062 = vld [vmem:[%s3 + $0xd8] sm:$0xff]
    %v1063 = vld [vmem:[%s3 + $0xe0] sm:$0xff]
    %v1064 = vld [vmem:[%s3 + $0xe8] sm:$0xff]
    %v1065 = vld [vmem:[%s3 + $0xf0] sm:$0xff]
    %v1066 = vld [vmem:[%s3 + $0xf8] sm:$0xff]
    %v1067 = vld [vmem:[%s4] sm:$0x3]
    %v1069 = vlaneseq
    %v1070 = vshrl.u32 %v1069, 7
    %v1071 = vsub.s32 0, %v1070
    %v1072 = vrot.slane %v1067, %v1071
    %v1073 = vlaneseq
    %v1074 = vshrl.u32 %v1073, 7
    %v1075 = vsub.s32 1, %v1074
    %v1076 = vrot.slane %v1067, %v1075
    %v1111 = vunpack.c.l.b16 %v1035
    %v1112 = vunpack.c.h.b16 %v1035
    %v1113 = vunpack.c.l.b16 %v1036
    %v1114 = vunpack.c.h.b16 %v1036
    %v1115 = vunpack.c.l.b16 %v1037
    %v1116 = vunpack.c.h.b16 %v1037
    %v1117 = vunpack.c.l.b16 %v1038
    %v1118 = vunpack.c.h.b16 %v1038
    %v1119 = vunpack.c.l.b16 %v1039
    %v1120 = vunpack.c.h.b16 %v1039
    %v1121 = vunpack.c.l.b16 %v1040
    %v1122 = vunpack.c.h.b16 %v1040
    %v1123 = vunpack.c.l.b16 %v1041
    %v1124 = vunpack.c.h.b16 %v1041
    %v1125 = vunpack.c.l.b16 %v1042
    %v1126 = vunpack.c.h.b16 %v1042
    %v1127 = vunpack.c.l.b16 %v1043
    %v1128 = vunpack.c.h.b16 %v1043
    %v1129 = vunpack.c.l.b16 %v1044
    %v1130 = vunpack.c.h.b16 %v1044
    %v1131 = vunpack.c.l.b16 %v1045
    %v1132 = vunpack.c.h.b16 %v1045
    %v1133 = vunpack.c.l.b16 %v1046
    %v1134 = vunpack.c.h.b16 %v1046
    %v1135 = vunpack.c.l.b16 %v1047
    %v1136 = vunpack.c.h.b16 %v1047
    %v1137 = vunpack.c.l.b16 %v1048
    %v1138 = vunpack.c.h.b16 %v1048
    %v1139 = vunpack.c.l.b16 %v1049
    %v1140 = vunpack.c.h.b16 %v1049
    %v1141 = vunpack.c.l.b16 %v1050
    %v1142 = vunpack.c.h.b16 %v1050
    %v1143 = vunpack.c.l.b16 %v1051
    %v1144 = vunpack.c.h.b16 %v1051
    %v1145 = vunpack.c.l.b16 %v1052
    %v1146 = vunpack.c.h.b16 %v1052
    %v1147 = vunpack.c.l.b16 %v1053
    %v1148 = vunpack.c.h.b16 %v1053
    %v1149 = vunpack.c.l.b16 %v1054
    %v1150 = vunpack.c.h.b16 %v1054
    %v1151 = vunpack.c.l.b16 %v1055
    %v1152 = vunpack.c.h.b16 %v1055
    %v1153 = vunpack.c.l.b16 %v1056
    %v1154 = vunpack.c.h.b16 %v1056
    %v1155 = vunpack.c.l.b16 %v1057
    %v1156 = vunpack.c.h.b16 %v1057
    %v1157 = vunpack.c.l.b16 %v1058
    %v1158 = vunpack.c.h.b16 %v1058
    %v1159 = vunpack.c.l.b16 %v1059
    %v1160 = vunpack.c.h.b16 %v1059
    %v1161 = vunpack.c.l.b16 %v1060
    %v1162 = vunpack.c.h.b16 %v1060
    %v1163 = vunpack.c.l.b16 %v1061
    %v1164 = vunpack.c.h.b16 %v1061
    %v1165 = vunpack.c.l.b16 %v1062
    %v1166 = vunpack.c.h.b16 %v1062
    %v1167 = vunpack.c.l.b16 %v1063
    %v1168 = vunpack.c.h.b16 %v1063
    %v1169 = vunpack.c.l.b16 %v1064
    %v1170 = vunpack.c.h.b16 %v1064
    %v1171 = vunpack.c.l.b16 %v1065
    %v1172 = vunpack.c.h.b16 %v1065
    %v1173 = vunpack.c.l.b16 %v1066
    %v1174 = vunpack.c.h.b16 %v1066
    %v1175 = vpack.c.b16 %v1113, %v1111
    %v1176 = vpack.c.b16 %v1114, %v1112
    %v1177 = vpack.c.b16 %v1117, %v1115
    %v1178 = vpack.c.b16 %v1118, %v1116
    %v1179 = vpack.c.b16 %v1121, %v1119
    %v1180 = vpack.c.b16 %v1122, %v1120
    %v1181 = vpack.c.b16 %v1125, %v1123
    %v1182 = vpack.c.b16 %v1126, %v1124
    %v1183 = vpack.c.b16 %v1129, %v1127
    %v1184 = vpack.c.b16 %v1130, %v1128
    %v1185 = vpack.c.b16 %v1133, %v1131
    %v1186 = vpack.c.b16 %v1134, %v1132
    %v1187 = vpack.c.b16 %v1137, %v1135
    %v1188 = vpack.c.b16 %v1138, %v1136
    %v1189 = vpack.c.b16 %v1141, %v1139
    %v1190 = vpack.c.b16 %v1142, %v1140
    %v1191 = vpack.c.b16 %v1145, %v1143
    %v1192 = vpack.c.b16 %v1146, %v1144
    %v1193 = vpack.c.b16 %v1149, %v1147
    %v1194 = vpack.c.b16 %v1150, %v1148
    %v1195 = vpack.c.b16 %v1153, %v1151
    %v1196 = vpack.c.b16 %v1154, %v1152
    %v1197 = vpack.c.b16 %v1157, %v1155
    %v1198 = vpack.c.b16 %v1158, %v1156
    %v1199 = vpack.c.b16 %v1161, %v1159
    %v1200 = vpack.c.b16 %v1162, %v1160
    %v1201 = vpack.c.b16 %v1165, %v1163
    %v1202 = vpack.c.b16 %v1166, %v1164
    %v1203 = vpack.c.b16 %v1169, %v1167
    %v1204 = vpack.c.b16 %v1170, %v1168
    %v1205 = vpack.c.b16 %v1173, %v1171
    %v1206 = vpack.c.b16 %v1174, %v1172
    %1239 = vmatprep.subr.bf16.mxu0 %v1176
    %1240 = vmatpush1.bf16.msra.mxu0 %v1175
    %1241 = vmatprep.subr.bf16.mxu0 %v1178
    %1242 = vmatpush1.bf16.msra.mxu0 %v1177
    %1243 = vmatprep.subr.bf16.mxu0 %v1180
    %1244 = vmatpush1.bf16.msra.mxu0 %v1179
    %1245 = vmatprep.subr.bf16.mxu0 %v1182
    %1246 = vmatpush1.bf16.msra.mxu0 %v1181
    %1247 = vmatprep.subr.bf16.mxu0 %v1184
    %1248 = vmatpush1.bf16.msra.mxu0 %v1183
    %1249 = vmatprep.subr.bf16.mxu0 %v1186
    %1250 = vmatpush1.bf16.msra.mxu0 %v1185
    %1251 = vmatprep.subr.bf16.mxu0 %v1188
    %1252 = vmatpush1.bf16.msra.mxu0 %v1187
    %1253 = vmatprep.subr.bf16.mxu0 %v1190
    %1254 = vmatpush1.bf16.msra.mxu0 %v1189
    %1255 = vmatprep.subr.bf16.mxu0 %v1192
    %1256 = vmatpush1.bf16.msra.mxu0 %v1191
    %1257 = vmatprep.subr.bf16.mxu0 %v1194
    %1258 = vmatpush1.bf16.msra.mxu0 %v1193
    %1259 = vmatprep.subr.bf16.mxu0 %v1196
    %1260 = vmatpush1.bf16.msra.mxu0 %v1195
    %1261 = vmatprep.subr.bf16.mxu0 %v1198
    %1262 = vmatpush1.bf16.msra.mxu0 %v1197
    %1263 = vmatprep.subr.bf16.mxu0 %v1200
    %1264 = vmatpush1.bf16.msra.mxu0 %v1199
    %1265 = vmatprep.subr.bf16.mxu0 %v1202
    %1266 = vmatpush1.bf16.msra.mxu0 %v1201
    %1267 = vmatprep.subr.bf16.mxu0 %v1204
    %1268 = vmatpush1.bf16.msra.mxu0 %v1203
    %1269 = vmatprep.subr.bf16.mxu0 %v1206
    %1270 = vmatpush1.bf16.msra.mxu0 %v1205
    %1271 = vmatprep.mubr.bf16.mxu0 %v1034
    %1272 = vmatmul.mubr.bf16.gmra.mrb[0].mxu0 %v1033
    %v1273 = vpop.f32.mrb[0].mxu0
    %v1274 = vadd.f32 %v1072, %v1273
    %v1275 = vpop.f32.mrb[0].mxu0
    %v1276 = vadd.f32 %v1076, %v1275
    %v1277 = vpop.f32.mrb[0].mxu0
    %v1278 = vpop.f32.mrb[0].mxu0
    %1279 = vdwg.mxu0
    %v1280 = vmax.f32 %v1274, 0.0
    %v1281 = vmax.f32 %v1276, 0.0
    %v1282 = vpack.c.bf16 %v1280, %v1280
    %v1283 = vpack.c.bf16 %v1281, %v1281
    %v1284 = vld [vmem:[#allocation4] sm:$0xf]
    %v1285 = vld [vmem:[#allocation4 + $0x4] sm:$0xf]
    %v1286 = vld [vmem:[#allocation4 + $0x8] sm:$0xf]
    %v1287 = vld [vmem:[#allocation4 + $0xc] sm:$0xf]
    %v1288 = vld [vmem:[#allocation4 + $0x10] sm:$0xf]
    %v1289 = vld [vmem:[#allocation4 + $0x14] sm:$0xf]
    %v1290 = vld [vmem:[#allocation4 + $0x18] sm:$0xf]
    %v1291 = vld [vmem:[#allocation4 + $0x1c] sm:$0xf]
    %v1292 = vld [vmem:[#allocation4 + $0x20] sm:$0xf]
    %v1293 = vld [vmem:[#allocation4 + $0x24] sm:$0xf]
    %v1294 = vld [vmem:[#allocation4 + $0x28] sm:$0xf]
    %v1295 = vld [vmem:[#allocation4 + $0x2c] sm:$0xf]
    %v1296 = vld [vmem:[#allocation4 + $0x30] sm:$0xf]
    %v1297 = vld [vmem:[#allocation4 + $0x34] sm:$0xf]
    %v1298 = vld [vmem:[#allocation4 + $0x38] sm:$0xf]
    %v1299 = vld [vmem:[#allocation4 + $0x3c] sm:$0xf]
    %v1300 = vld [vmem:[#allocation4 + $0x40] sm:$0xf]
    %v1301 = vld [vmem:[#allocation4 + $0x44] sm:$0xf]
    %v1302 = vld [vmem:[#allocation4 + $0x48] sm:$0xf]
    %v1303 = vld [vmem:[#allocation4 + $0x4c] sm:$0xf]
    %v1304 = vld [vmem:[#allocation4 + $0x50] sm:$0xf]
    %v1305 = vld [vmem:[#allocation4 + $0x54] sm:$0xf]
    %v1306 = vld [vmem:[#allocation4 + $0x58] sm:$0xf]
    %v1307 = vld [vmem:[#allocation4 + $0x5c] sm:$0xf]
    %v1308 = vld [vmem:[#allocation4 + $0x60] sm:$0xf]
    %v1309 = vld [vmem:[#allocation4 + $0x64] sm:$0xf]
    %v1310 = vld [vmem:[#allocation4 + $0x68] sm:$0xf]
    %v1311 = vld [vmem:[#allocation4 + $0x6c] sm:$0xf]
    %v1312 = vld [vmem:[#allocation4 + $0x70] sm:$0xf]
    %v1313 = vld [vmem:[#allocation4 + $0x74] sm:$0xf]
    %v1314 = vld [vmem:[#allocation4 + $0x78] sm:$0xf]
    %v1315 = vld [vmem:[#allocation4 + $0x7c] sm:$0xf]
    %v1316 = vld [vmem:[%s6] sm:$0x1]
    %v1318 = vlaneseq
    %v1319 = vshrl.u32 %v1318, 7
    %v1320 = vsub.s32 0, %v1319
    %v1321 = vrot.slane %v1316, %v1320
    %v1355 = vunpack.c.l.b16 %v1284
    %v1356 = vunpack.c.l.b16 %v1285
    %v1357 = vunpack.c.l.b16 %v1286
    %v1358 = vunpack.c.l.b16 %v1287
    %v1359 = vunpack.c.l.b16 %v1288
    %v1360 = vunpack.c.l.b16 %v1289
    %v1361 = vunpack.c.l.b16 %v1290
    %v1362 = vunpack.c.l.b16 %v1291
    %v1363 = vunpack.c.l.b16 %v1292
    %v1364 = vunpack.c.l.b16 %v1293
    %v1365 = vunpack.c.l.b16 %v1294
    %v1366 = vunpack.c.l.b16 %v1295
    %v1367 = vunpack.c.l.b16 %v1296
    %v1368 = vunpack.c.l.b16 %v1297
    %v1369 = vunpack.c.l.b16 %v1298
    %v1370 = vunpack.c.l.b16 %v1299
    %v1371 = vunpack.c.l.b16 %v1300
    %v1372 = vunpack.c.l.b16 %v1301
    %v1373 = vunpack.c.l.b16 %v1302
    %v1374 = vunpack.c.l.b16 %v1303
    %v1375 = vunpack.c.l.b16 %v1304
    %v1376 = vunpack.c.l.b16 %v1305
    %v1377 = vunpack.c.l.b16 %v1306
    %v1378 = vunpack.c.l.b16 %v1307
    %v1379 = vunpack.c.l.b16 %v1308
    %v1380 = vunpack.c.l.b16 %v1309
    %v1381 = vunpack.c.l.b16 %v1310
    %v1382 = vunpack.c.l.b16 %v1311
    %v1383 = vunpack.c.l.b16 %v1312
    %v1384 = vunpack.c.l.b16 %v1313
    %v1385 = vunpack.c.l.b16 %v1314
    %v1386 = vunpack.c.l.b16 %v1315
    %v1387 = vpack.c.b16 %v1356, %v1355
    %v1388 = vpack.c.b16 %v1358, %v1357
    %v1389 = vpack.c.b16 %v1360, %v1359
    %v1390 = vpack.c.b16 %v1362, %v1361
    %v1391 = vpack.c.b16 %v1364, %v1363
    %v1392 = vpack.c.b16 %v1366, %v1365
    %v1393 = vpack.c.b16 %v1368, %v1367
    %v1394 = vpack.c.b16 %v1370, %v1369
    %v1395 = vpack.c.b16 %v1372, %v1371
    %v1396 = vpack.c.b16 %v1374, %v1373
    %v1397 = vpack.c.b16 %v1376, %v1375
    %v1398 = vpack.c.b16 %v1378, %v1377
    %v1399 = vpack.c.b16 %v1380, %v1379
    %v1400 = vpack.c.b16 %v1382, %v1381
    %v1401 = vpack.c.b16 %v1384, %v1383
    %v1402 = vpack.c.b16 %v1386, %v1385
    %1419 = vmatprep.subr.bf16.mxu0 0
    %1420 = vmatpush1.bf16.msra.mxu0 %v1387
    %1421 = vmatprep.subr.bf16.mxu0 0
    %1422 = vmatpush1.bf16.msra.mxu0 %v1388
    %1423 = vmatprep.subr.bf16.mxu0 0
    %1424 = vmatpush1.bf16.msra.mxu0 %v1389
    %1425 = vmatprep.subr.bf16.mxu0 0
    %1426 = vmatpush1.bf16.msra.mxu0 %v1390
    %1427 = vmatprep.subr.bf16.mxu0 0
    %1428 = vmatpush1.bf16.msra.mxu0 %v1391
    %1429 = vmatprep.subr.bf16.mxu0 0
    %1430 = vmatpush1.bf16.msra.mxu0 %v1392
    %1431 = vmatprep.subr.bf16.mxu0 0
    %1432 = vmatpush1.bf16.msra.mxu0 %v1393
    %1433 = vmatprep.subr.bf16.mxu0 0
    %1434 = vmatpush1.bf16.msra.mxu0 %v1394
    %1435 = vmatprep.subr.bf16.mxu0 0
    %1436 = vmatpush1.bf16.msra.mxu0 %v1395
    %1437 = vmatprep.subr.bf16.mxu0 0
    %1438 = vmatpush1.bf16.msra.mxu0 %v1396
    %1439 = vmatprep.subr.bf16.mxu0 0
    %1440 = vmatpush1.bf16.msra.mxu0 %v1397
    %1441 = vmatprep.subr.bf16.mxu0 0
    %1442 = vmatpush1.bf16.msra.mxu0 %v1398
    %1443 = vmatprep.subr.bf16.mxu0 0
    %1444 = vmatpush1.bf16.msra.mxu0 %v1399
    %1445 = vmatprep.subr.bf16.mxu0 0
    %1446 = vmatpush1.bf16.msra.mxu0 %v1400
    %1447 = vmatprep.subr.bf16.mxu0 0
    %1448 = vmatpush1.bf16.msra.mxu0 %v1401
    %1449 = vmatprep.subr.bf16.mxu0 0
    %1450 = vmatpush1.bf16.msra.mxu0 %v1402
    %1451 = vmatprep.mubr.bf16.mxu0 %v1283
    %1452 = vmatmul.mubr.bf16.gmra.mrb[0].mxu0 %v1282
    %v1453 = vpop.f32.mrb[0].mxu0
    %v1454 = vadd.f32 %v1321, %v1453
    %v1455 = vpop.f32.mrb[0].mxu0
    %v1456 = vpop.f32.mrb[0].mxu0
    %v1457 = vpop.f32.mrb[0].mxu0
    %1458 = vdwg.mxu0
    %v1459 = vxor.u32 %v1454, 2147483648
    %v1460 = vmul.f32 %v1459, 1.442695
    %v1461 = vpow.pop %v1460
    %v1462 = vadd.f32 %v1461, 1.0
    %v1463 = vrcp.pop %v1462
    %v1464 = vmul.f32 1.0, %v1463
    %1465 = vst [vmem:[%s7] sm:$0xff] %v1464
    // Predicated region
    $region38: #{_forward_jit.1} parent=1 // pred_check
      _
    $region39: #{_forward_jit.1} parent=1 // pred_check_branch
      %1467 = sbr.rel (0) target = $region41
    $region40: #{_forward_jit.1} parent=1 // pred_region
      _
    $region41: #{_forward_jit.1} parent=1 // pred_fallthru
      _
    // Predicated region
    $region42: #{_forward_jit.1} parent=1 // pred_check
      _
    $region43: #{_forward_jit.1} parent=1 // pred_check_branch
      %1469 = sbr.rel (0) target = $region45
    $region44: #{_forward_jit.1} parent=1 // pred_region
      _
    $region45: #{_forward_jit.1} parent=1 // pred_fallthru
      _
    %1470 = vsyncpa [#allocation3], 1
    %1471 = vsyncpa [#allocation5], 1

</llo_original>
